<compile_context>
chip_gen: v5e
topology: v5e:2x2
jax: 0.10.0
libtpu: 0.0.40
codegen_flags: <defaults>
</compile_context>

<pallas_src>
import jax
import jax.numpy as jnp
from jax.experimental import pallas as pl
from jax.experimental.pallas import tpu as pltpu


# ---------------------------------------------------------------------------
# Kernels
# ---------------------------------------------------------------------------
def _diff_sq_partial_kernel(x_ref, y_ref, len_ref, out_ref):
    """Per-tile partial sums of masked squared temporal-diff errors.

    x_ref, y_ref : (Bp, Tt) input blocks (native dtype; up-cast here)
    len_ref      : (Bp, 1) int32 per-row valid lengths (pre-clipped to <= Tp)
    out_ref      : (1, Bp, 1) f32 per-tile per-row partial sums

    Tile k covers columns [k*Tt, (k+1)*Tt).  Local column j >= 1 contributes
    the diff term with global index k*Tt + j - 1 iff j < len - k*Tt.  The j==0
    term of each tile (the cross-tile boundary diff) is added back in the
    wrapper, so tiles are fully independent ("parallel" grid axis, no carry,
    no shared accumulator).
    """
    k = pl.program_id(0)
    tile_t = x_ref.shape[1]

    e = x_ref[...].astype(jnp.float32) - y_ref[...].astype(jnp.float32)
    # d[:, j] = e[:, j] - e[:, j-1] via an XLU lane rotate (wrap column j==0 is
    # masked out below).
    d = e - pltpu.roll(e, shift=1, axis=1)

    j = jax.lax.broadcasted_iota(jnp.int32, e.shape, 1)
    valid = (j >= 1) & (j < (len_ref[...] - k * tile_t))

    # Select-form masking so garbage (even NaN/Inf) in the padded tail of the
    # last partial tile cannot leak into the sum.
    out_ref[0] = jnp.sum(jnp.where(valid, d * d, 0.0), axis=1, keepdims=True)


def _diff_sq_small_kernel(x_ref, y_ref, len_ref, out_ref):
    """Single-block path for T < 128 (slice-based diff; too small to tile)."""
    e = x_ref[...].astype(jnp.float32) - y_ref[...].astype(jnp.float32)
    d = e[:, 1:] - e[:, :-1]
    col = jax.lax.broadcasted_iota(jnp.int32, d.shape, 1)
    valid = col < (len_ref[...] - 1)
    out_ref[...] = jnp.sum(jnp.where(valid, d * d, 0.0), axis=1, keepdims=True)


# ---------------------------------------------------------------------------
# Wrapper helpers
# ---------------------------------------------------------------------------
def _vmem_limit_bytes():
    """Generation-aware scoped-VMEM limit: big tiles on v5e/v6e (128 MiB
    physical), stay under the cap on v7x (64 MiB)."""
    cap = 64 * 1024 * 1024
    try:
        cap = int(getattr(pltpu.get_tpu_info(), "vmem_capacity_bytes", cap))
    except Exception:  # no TPU info available -> conservative default
        pass
    return max(16 * 1024 * 1024, min(96 * 1024 * 1024, cap - 16 * 1024 * 1024))


def _pick_pack_factor(B, T):
    """Sublane-packing factor r: (B, T) -> (B*r, T/r) is a free row-major
    reshape; target B*r >= 8 so f32 vregs are not mostly padding."""
    if B >= 8 or T < 256:
        return 1
    want = -(-8 // B)  # ceil(8 / B)
    candidates = list(range(want, 4 * want + 1)) + list(range(want - 1, 1, -1))
    for r in candidates:
        if r > 1 and T % r == 0 and T // r >= 128:
            return r
    return 1


def _choose_tile(Bp, Tp, itemsize, vmem_limit, tile_t):
    """Tile width (multiple of 128, <= floor(Tp/128)*128) and tile count.

    Budget: 2 inputs x 2 pipeline buffers (native dtype) plus ~6 f32
    temporaries per element, targeting <= ~60% of the scoped VMEM limit.
    When the whole array fits this returns a single tile (VMEM-resident fast
    path, no per-step pipeline overhead)."""
    max_tile = (Tp // 128) * 128  # keep block dims <= array dims
    if tile_t is None:
        per_col = Bp * (4 * itemsize + 24)
        cols = int(0.6 * vmem_limit) // max(1, per_col)
        tile_t = (cols // 128) * 128
    else:
        tile_t = (tile_t // 128) * 128
    tile_t = max(128, min(tile_t, max_tile))
    return tile_t, -(-Tp // tile_t)


def _boundary_sq_sum(x, y, lens, cols):
    """Masked squared diff-error terms at boundary columns `cols` (the diff
    index is cols-1); tiny XLA gather, all f32."""
    xa = jnp.take(x, cols, axis=1).astype(jnp.float32)
    xb = jnp.take(x, cols - 1, axis=1).astype(jnp.float32)
    ya = jnp.take(y, cols, axis=1).astype(jnp.float32)
    yb = jnp.take(y, cols - 1, axis=1).astype(jnp.float32)
    d = (xa - xb) - (ya - yb)
    valid = cols[None, :] < lens  # (B, K)
    return jnp.sum(jnp.where(valid, d * d, 0.0))


# ---------------------------------------------------------------------------
# Public entry point
# ---------------------------------------------------------------------------
def differential_spectral_loss(x, target, length=None, *, tile_t=None, pack=True):
    """JAX/Pallas equivalent of DifferentailSpectralLoss.forward (MSE loss_func).

    x, target: (B, T) float arrays (streamed in native dtype, f32 accumulation)
    length:    optional (B,) int lengths
    returns:   scalar float32 loss
    """
    B, T = x.shape
    assert target.shape == (B, T)

    if length is None:
        lens = jnp.full((B, 1), T, dtype=jnp.int32)
    else:
        # Clip to [0, T]; the kernel mask relies on lens <= T.
        lens = jnp.clip(length.astype(jnp.int32).reshape(B, 1), 0, T)

    # Denominator = number of valid diff terms, straight from the integer lens.
    # NOTE: clamped to >= 1 (torch would return NaN when every length <= 1).
    den = jnp.maximum(jnp.sum(jnp.maximum(lens - 1, 0)).astype(jnp.float32), 1.0)

    total = jnp.float32(0.0)

    # --- sublane packing: (B, T) -> (B*r, T/r), free row-major reshape -------
    r = _pick_pack_factor(B, T) if pack else 1
    if r > 1:
        C = T // r
        pack_cols = jnp.arange(1, r, dtype=jnp.int32) * C
        total = total + _boundary_sq_sum(x, target, lens, pack_cols)
        off = (jnp.arange(r, dtype=jnp.int32) * C)[None, :]     # (1, r)
        lens_w = jnp.clip(lens - off, 0, C).reshape(B * r, 1)
        x_w = x.reshape(B * r, C)
        y_w = target.reshape(B * r, C)
        Bp, Tp = B * r, C
    else:
        x_w, y_w, lens_w = x, target, lens
        Bp, Tp = B, T

    if Tp < 128:
        # Tiny inputs: one full block, slice-based diff, no tiling machinery.
        partials = pl.pallas_call(
            _diff_sq_small_kernel,
            out_shape=jax.ShapeDtypeStruct((Bp, 1), jnp.float32),
            in_specs=[
                pl.BlockSpec((Bp, Tp), lambda: (0, 0)),
                pl.BlockSpec((Bp, Tp), lambda: (0, 0)),
                pl.BlockSpec((Bp, 1), lambda: (0, 0)),
            ],
            out_specs=pl.BlockSpec((Bp, 1), lambda: (0, 0)),
        )(x_w, y_w, lens_w)
    else:
        vmem_limit = _vmem_limit_bytes()
        itemsize = max(jnp.dtype(x.dtype).itemsize,
                       jnp.dtype(target.dtype).itemsize)
        Tt, num_tiles = _choose_tile(Bp, Tp, itemsize, vmem_limit, tile_t)

        if num_tiles > 1:
            tile_cols = jnp.arange(1, num_tiles, dtype=jnp.int32) * Tt
            total = total + _boundary_sq_sum(x_w, y_w, lens_w, tile_cols)

        bytes_accessed = (Bp * Tp * (jnp.dtype(x.dtype).itemsize
                                     + jnp.dtype(target.dtype).itemsize)
                          + Bp * 4 + num_tiles * Bp * 4)

        partials = pl.pallas_call(
            _diff_sq_partial_kernel,
            out_shape=jax.ShapeDtypeStruct((num_tiles, Bp, 1), jnp.float32),
            grid=(num_tiles,),
            in_specs=[
                pl.BlockSpec((Bp, Tt), lambda k: (0, k)),
                pl.BlockSpec((Bp, Tt), lambda k: (0, k)),
                pl.BlockSpec((Bp, 1), lambda k: (0, 0)),
            ],
            out_specs=pl.BlockSpec((1, Bp, 1), lambda k: (k, 0, 0)),
            compiler_params=pltpu.CompilerParams(
                dimension_semantics=("parallel",),
                vmem_limit_bytes=vmem_limit,
            ),
            cost_estimate=pl.CostEstimate(
                flops=8 * Bp * Tp,
                transcendentals=0,
                bytes_accessed=bytes_accessed,
            ),
        )(x_w, y_w, lens_w)

    total = total + jnp.sum(partials)
    return total / den


# ---------------------------------------------------------------------------
# Pure-JAX reference + self-test
# ---------------------------------------------------------------------------
def _reference(x, target, length=None):
    x = x.astype(jnp.float32)
    target = target.astype(jnp.float32)
    d = (x[:, 1:] - x[:, :-1]) - (target[:, 1:] - target[:, :-1])
    if length is None:
        return jnp.mean(d * d)
    b, tm1 = d.shape
    col = jax.lax.broadcasted_iota(jnp.int32, (b, tm1), 1)
    mask = (col < (length.reshape(b, 1) - 1)).astype(jnp.float32)
    return jnp.sum(d * d * mask) / jnp.sum(mask)


if __name__ == "__main__":
    key = jax.random.PRNGKey(0)
    k1, k2, k3, k4 = jax.random.split(key, 4)

    # --- small, single-block path (T < 128) ---
    B, T = 2, 16
    x = jax.random.normal(k1, (B, T), dtype=jnp.float32)
    tgt = jax.random.normal(k2, (B, T), dtype=jnp.float32)
    length = jnp.array([16, 10], dtype=jnp.int32)
    for l in (None, length):
        got = differential_spectral_loss(x, tgt, l)
        jax.block_until_ready(got)
        want = _reference(x, tgt, l)
        assert jnp.allclose(got, want, rtol=1e-5, atol=1e-5), (got, want)

    # --- default path: sublane packing (4,400)->(8,200), mixed lengths ---
    B2, T2 = 4, 400
    x2 = jax.random.normal(k3, (B2, T2), dtype=jnp.float32)
    t2 = jax.random.normal(k4, (B2, T2), dtype=jnp.float32)
    length2 = jnp.array([400, 131, 257, 1], dtype=jnp.int32)
    for l in (None, length2):
        for pack in (True, False):
            got = differential_spectral_loss(x2, t2, l, pack=pack)
            jax.block_until_ready(got)
            want = _reference(x2, t2, l)
            assert jnp.allclose(got, want, rtol=1e-5, atol=1e-5), (got, want, pack)

    # --- forced multi-tile path (parallel grid + tile-boundary fixup) ---
    for pack in (True, False):
        got = differential_spectral_loss(x2, t2, length2, tile_t=128, pack=pack)
        jax.block_until_ready(got)
        want = _reference(x2, t2, length2)
        assert jnp.allclose(got, want, rtol=1e-5, atol=1e-5), (got, want, pack)

    # --- native bf16 streaming (up-cast inside the kernel, f32 accumulation) ---
    xb, tb = x2.astype(jnp.bfloat16), t2.astype(jnp.bfloat16)
    got = differential_spectral_loss(xb, tb, length2, tile_t=128)
    jax.block_until_ready(got)
    want = _reference(xb, tb, length2)
    assert jnp.allclose(got, want, rtol=1e-4, atol=1e-4), (got, want)

    print("KERNEL_OK")
</pallas_src>

<mosaic_0001>
module attributes {stable_mosaic.version = 11 : i64} {
  func.func @_diff_sq_small_kernel(%arg0: memref<2x16xf32, #tpu.memory_space<vmem>>, %arg1: memref<2x16xf32, #tpu.memory_space<vmem>>, %arg2: memref<2x1xi32, #tpu.memory_space<vmem>>, %arg3: memref<2x1xf32, #tpu.memory_space<vmem>>) attributes {dimension_semantics = [], scalar_prefetch = 0 : i64, scratch_operands = 0 : i64, tpu.core_type = #tpu.core_type<tc>} {
    %c0 = arith.constant 0 : index
    %c0_0 = arith.constant 0 : index
    %0 = vector.load %arg0[%c0, %c0_0] : memref<2x16xf32, #tpu.memory_space<vmem>>, vector<2x16xf32>
    %c0_1 = arith.constant 0 : index
    %c0_2 = arith.constant 0 : index
    %1 = vector.load %arg1[%c0_1, %c0_2] : memref<2x16xf32, #tpu.memory_space<vmem>>, vector<2x16xf32>
    %2 = arith.subf %0, %1 : vector<2x16xf32>
    %3 = vector.extract_strided_slice %2 {offsets = [0, 1], sizes = [2, 15], strides = [1, 1]} : vector<2x16xf32> to vector<2x15xf32>
    %4 = vector.extract_strided_slice %2 {offsets = [0, 0], sizes = [2, 15], strides = [1, 1]} : vector<2x16xf32> to vector<2x15xf32>
    %5 = arith.subf %3, %4 : vector<2x15xf32>
    %6 = tpu.iota {dimensions = array<i32: 1>} : vector<2x15xi32>
    %c0_3 = arith.constant 0 : index
    %c0_4 = arith.constant 0 : index
    %7 = vector.load %arg2[%c0_3, %c0_4] : memref<2x1xi32, #tpu.memory_space<vmem>>, vector<2x1xi32>
    %c1_i32 = arith.constant 1 : i32
    %8 = vector.broadcast %c1_i32 : i32 to vector<2x1xi32>
    %9 = arith.subi %7, %8 : vector<2x1xi32>
    %10 = vector.broadcast %9 : vector<2x1xi32> to vector<2x15xi32>
    %11 = arith.cmpi slt, %6, %10 : vector<2x15xi32>
    %12 = arith.mulf %5, %5 : vector<2x15xf32>
    %cst = arith.constant 0.000000e+00 : f32
    %13 = vector.broadcast %cst : f32 to vector<2x15xf32>
    %14 = arith.select %11, %12, %13 : vector<2x15xi1>, vector<2x15xf32>
    %cst_5 = arith.constant dense<0.000000e+00> : vector<2xf32>
    %15 = vector.multi_reduction <add>, %14, %cst_5 [1] : vector<2x15xf32> to vector<2xf32>
    %16 = vector.shape_cast %15 : vector<2xf32> to vector<2x1xf32>
    %c0_6 = arith.constant 0 : index
    %c0_7 = arith.constant 0 : index
    %17 = vector.load %arg3[%c0_6, %c0_7] : memref<2x1xf32, #tpu.memory_space<vmem>>, vector<2x1xf32>
    tpu.vector_store %arg3[%c0_6, %c0_7], %16 {strides = array<i32>} : memref<2x1xf32, #tpu.memory_space<vmem>>, vector<2x1xf32>,
    return
  }
}

</mosaic_0001>

<llo_original>
// kernel: tpu_custom_call.1
$region0: #{tpu_custom_call.1}
  #allocation0 [shape = 'u32[]', space=smem, size = 0x4, offset = 0x4, fixed_abs, tag = 'smem constant byte address 0x4 - core index']
  #allocation1 [shape = 'u32[72,128]{1,0:T(1,128)}', space=vmem, size = 0x9000, scoped, tag = 'internal scratch']
  %s0 = inlined_call_operand.vmem [shape: f32[2,16], index: 0, kind: input, shape index: {}]
  %s1 = inlined_call_operand.hbm [shape: f32[2,16], index: 1, kind: input, shape index: {}]
  %s2 = inlined_call_operand.vmem [shape: s32[2,1], index: 2, kind: input, shape index: {}]
  %s3 = inlined_call_operand.vmem [shape: f32[2,1], index: 3, kind: output, shape index: {}]
  %s4 = sld [smem:[#allocation0]]
  $region26: #{tpu_custom_call.1} parent=0
    _
  %s6 = ssub.s32 1, %s4
  %s7 = scalar_select 0, %s6, %s4
  $region1: #{tpu_custom_call.1} parent=0
    #allocation2 [shape = 'u8[1024]{0}', space=vmem, size = 0x400, scoped, tag = 'input window, operand 1, single buffered']
    #allocation3 [shape = 's32[1]{0}', space=sflag, size = 0x4, scoped, tag = 'scoped memory for tpu_custom_call.1']
    %8 = vsyncpa [#allocation3], 0
    // Predicated region
    $region2: #{tpu_custom_call.1} parent=1 // pred_check
      _
    $region3: #{tpu_custom_call.1} parent=1 // pred_check_branch
      %10 = sbr.rel (0) target = $region5
    $region4: #{tpu_custom_call.1} parent=1 // pred_region
      _
    $region5: #{tpu_custom_call.1} parent=1 // pred_fallthru
      _
    // Predicated region
    $region6: #{tpu_custom_call.1} parent=1 // pred_check
      _
    $region7: #{tpu_custom_call.1} parent=1 // pred_check_branch
      %12 = sbr.rel (0) target = $region9
    $region8: #{tpu_custom_call.1} parent=1 // pred_region
      %14 = vsyncadd [#allocation3], 0
      %s16 = sshll.u32 %s1, 4
      %s17 = int_to_ptr.hbm [resolvable:$true] %s16
      %s18 = sshll.u32 [#allocation2], 4
      %s19 = int_to_ptr.vmem [resolvable:$true] %s18
      %21 = dma.hbm_to_vmem [thread:$0]  %s17, 32, %s19, [#allocation3]
    $region9: #{tpu_custom_call.1} parent=1 // pred_fallthru
      _
    // Predicated region
    $region10: #{tpu_custom_call.1} parent=1 // pred_check
      _
    $region11: #{tpu_custom_call.1} parent=1 // pred_check_branch
      %23 = sbr.rel (0) target = $region13
    $region12: #{tpu_custom_call.1} parent=1 // pred_region
      _
    $region13: #{tpu_custom_call.1} parent=1 // pred_fallthru
      _
    // Predicated region
    $region14: #{tpu_custom_call.1} parent=1 // pred_check
      _
    $region15: #{tpu_custom_call.1} parent=1 // pred_check_branch
      %25 = sbr.rel (0) target = $region17
    $region16: #{tpu_custom_call.1} parent=1 // pred_region
      %27 = dma.done [#allocation3], 32
    $region17: #{tpu_custom_call.1} parent=1 // pred_fallthru
      _
    %v28 = vld [vmem:[%s0] sm:$0x3]
    %v29 = vld [vmem:[#allocation2] sm:$0x3]
    %v30 = vsub.f32 %v28, %v29
    %32 = vrot.lane.b32.xlu0 %v30, 1
    %v33 = vpop.permute.xlu0 %32
    %v35 = vsub.f32 %v30, %v33
    %v36 = vlaneseq
    %v37 = vand.u32 %v36, 127
    %v38 = vld [vmem:[%s2] sm:$0x3]
    %v39 = vsub.s32 %v38, 1
    %40 = vset.pattern.permute.xlu0 0
    %41 = vperm.xlu0 %40, %v39
    %v42 = vpop.permute.xlu0 %41
    %vm43 = vcmp.lt.s32.totalorder %v37, %v42
    %v44 = vmul.f32 %v35, %v35
    %46 = vrot.lane.b32.xlu0 %v44, 127
    %v47 = vpop.permute.xlu0 %46
    %v49 = vsel %vm43, %v47, 0.0
    %vm50 = vcmask 115712
    %v51 = vsel %vm50, %v49, 0.0
    %52 = vadd.xlane.f32.xlu0 %v51
    %v53 = vpop.xlane.xlu0 %52
    %vm54 = vcmask 1024
    %55 = vst.msk [vmem:[%s3] sm:$0x3] %vm54, %v53
    // Predicated region
    $region18: #{tpu_custom_call.1} parent=1 // pred_check
      _
    $region19: #{tpu_custom_call.1} parent=1 // pred_check_branch
      %57 = sbr.rel (0) target = $region21
    $region20: #{tpu_custom_call.1} parent=1 // pred_region
      _
    $region21: #{tpu_custom_call.1} parent=1 // pred_fallthru
      _
    // Predicated region
    $region22: #{tpu_custom_call.1} parent=1 // pred_check
      _
    $region23: #{tpu_custom_call.1} parent=1 // pred_check_branch
      %59 = sbr.rel (0) target = $region25
    $region24: #{tpu_custom_call.1} parent=1 // pred_region
      _
    $region25: #{tpu_custom_call.1} parent=1 // pred_fallthru
      _
    %60 = vsyncpa [#allocation3], 1

</llo_original>
